<compile_context>
chip_gen: v7x
topology: tpu7x:2x2x1
jax: 0.10.0
libtpu: 0.0.40
codegen_flags: <defaults>
</compile_context>

<pallas_src>
import functools

import jax
import jax.numpy as jnp
from jax import lax
from jax.experimental import pallas as pl
from jax.experimental.pallas import tpu as pltpu


def sae_kernel(x_ref, w1_ref, b1_ref, w2_ref, b2_ref, w3_ref, b3_ref,
               w4_ref, b4_ref, out_ref):
    x = x_ref[...]                                   # (TILE_B, N), f32 or bf16
    # fc1: x @ w1.T expressed as dot_general (trans_b) so the lane-dense
    # (20, N) weight never needs an XLU transpose; accumulate in f32.
    z1 = lax.dot_general(x, w1_ref[...],
                         dimension_numbers=(((1,), (1,)), ((), ())),
                         preferred_element_type=jnp.float32)
    # Elementwise/sigmoid chain in f32 (v5e VPU/EUP have no bf16 support).
    h1 = jax.nn.sigmoid(z1 + b1_ref[...].astype(jnp.float32))
    h2 = jax.nn.sigmoid(jnp.dot(h1, w2_ref[...],
                                preferred_element_type=jnp.float32) + b2_ref[...])
    h3 = jax.nn.sigmoid(jnp.dot(h2, w3_ref[...],
                                preferred_element_type=jnp.float32) + b3_ref[...])
    # fc4: cast the tiny (TILE_B, 20) activation to the weight's streaming
    # dtype so bf16 weights hit the native MXU path; f32 accumulation.
    out = jnp.dot(h3.astype(w4_ref.dtype), w4_ref[...],
                  preferred_element_type=jnp.float32) + b4_ref[...].astype(jnp.float32)
    out_ref[...] = out.astype(out_ref.dtype)


def _round_up(x, m):
    return pl.cdiv(x, m) * m


@functools.partial(jax.jit, static_argnames=("tile_b",))
def sae_forward(x, w1, b1, w2, b2, w3, b3, w4, b4, *, tile_b=None):
    B, N = x.shape
    H1 = w1.shape[0]          # 20
    H2 = w2.shape[1]          # 10
    itemsize = jnp.dtype(x.dtype).itemsize

    weight_bytes = sum(int(a.size) * jnp.dtype(a.dtype).itemsize
                       for a in (w1, b1, w2, b2, w3, b3, w4, b4))

    # --- generation-aware VMEM budget (v7x: 64 MiB, v5e/v6e: 128 MiB) -------
    try:
        vmem_cap = int(pltpu.get_tpu_info().vmem_capacity_bytes)
    except Exception:
        vmem_cap = 64 * 1024 * 1024        # assume the tightest chip (v7x)
    usable_vmem = vmem_cap * 3 // 4        # 48 MiB on v7x, 96 MiB on v5e/v6e
    headroom = 4 * 1024 * 1024

    row_bytes = N * itemsize
    per_row = 2 * 2 * row_bytes            # (x + out) * 2 pipeline buffers

    if tile_b is None:
        # Bytes-based floor: ~8 MiB streamed block amortizes the ~0.35 us
        # per-grid-step overhead to noise.
        tile_b = _round_up(pl.cdiv(8 * 1024 * 1024, row_bytes), 8)
        # VMEM ceiling: double-buffered x/out tiles + (double-buffered)
        # resident weights must fit the budget.
        tile_budget = max(usable_vmem - 2 * weight_bytes - headroom, 8 * per_row)
        tile_b = min(tile_b, max(8, (tile_budget // per_row) // 8 * 8))
        # Keep >= 2 grid steps when possible so the "parallel" batch axis can
        # feed both v7x TensorCores (harmless on single-TC v5e/v6e).
        if B >= 16:
            tile_b = min(tile_b, _round_up(pl.cdiv(B, 2), 8))
    tile_b = int(min(tile_b, B))
    if tile_b < B:
        tile_b = max(8, (tile_b // 8) * 8)   # partial-block rule: multiple of 8
    num_tiles = int(pl.cdiv(B, tile_b))

    vmem_limit = int(min(max(2 * weight_bytes + tile_b * per_row + headroom,
                             32 * 1024 * 1024),
                         usable_vmem))

    cost = pl.CostEstimate(
        flops=int(2 * B * N * H1 * 2 + 2 * B * H1 * H2 * 2),
        transcendentals=int(B * (H1 + H2 + H1)),
        bytes_accessed=int(2 * B * row_bytes + weight_bytes),
    )

    stream_spec = pl.BlockSpec((tile_b, N), lambda i: (i, 0))

    def resident_spec(a):
        # TODO(synk): single-buffer these grid-invariant inputs with
        # pipeline_mode=pl.Buffered(1) and drop the 2x weight accounting above
        # to reclaim VMEM for very large N.
        return pl.BlockSpec(a.shape, lambda i: (0, 0))

    out = pl.pallas_call(
        sae_kernel,
        out_shape=jax.ShapeDtypeStruct((B, N), x.dtype),
        grid=(num_tiles,),
        in_specs=[
            stream_spec,          # x  (streamed, double-buffered)
            resident_spec(w1),    # w1 (20, N) lane-dense, VMEM-resident
            resident_spec(b1),    # b1 (1, 20)
            resident_spec(w2),    # w2 (20, 10)
            resident_spec(b2),    # b2 (1, 10)
            resident_spec(w3),    # w3 (10, 20)
            resident_spec(b3),    # b3 (1, 20)
            resident_spec(w4),    # w4 (20, N)
            resident_spec(b4),    # b4 (1, N)
        ],
        out_specs=stream_spec,
        compiler_params=pltpu.CompilerParams(
            dimension_semantics=("parallel",),   # megacore sharding on v7x
            vmem_limit_bytes=vmem_limit,
        ),
        cost_estimate=cost,
    )(x, w1, b1, w2, b2, w3, b3, w4, b4)
    # TODO(synk): for very large N (resident weights approaching the VMEM
    # budget) add a second grid axis over N chunks: fc1 becomes an "arbitrary"
    # reduction with a (tile_b, 20) accumulator and fc4 output is N-tiled.
    return out


def init_linear(key, in_f, out_f, *, lane_dense=False):
    """PyTorch-style uniform(-1/sqrt(in), 1/sqrt(in)) init.

    lane_dense=True returns the weight as (out_f, in_f) (fc1/fc4-style storage
    used by the kernel); otherwise (in_f, out_f) so y = x @ w + b.
    """
    kw, kb = jax.random.split(key)
    bound = 1.0 / float(in_f) ** 0.5
    shape = (out_f, in_f) if lane_dense else (in_f, out_f)
    w = jax.random.uniform(kw, shape, jnp.float32, -bound, bound)
    b = jax.random.uniform(kb, (1, out_f), jnp.float32, -bound, bound)
    return w, b


def sae_reference(x, w1, b1, w2, b2, w3, b3, w4, b4):
    h1 = jax.nn.sigmoid(x @ w1.T + b1)        # w1 is (20, N)
    h2 = jax.nn.sigmoid(h1 @ w2 + b2)
    h3 = jax.nn.sigmoid(h2 @ w3 + b3)
    return h3 @ w4 + b4                       # w4 is (20, N)


if __name__ == "__main__":
    # Small synthetic shapes: N plays the role of (max_movie_index + 1).
    # Deliberately non-multiples of 8/128 to exercise the masked-store paths.
    B, N, H1, H2 = 6, 200, 20, 10

    key = jax.random.PRNGKey(0)
    kx, k1, k2, k3, k4 = jax.random.split(key, 5)

    x = jax.random.normal(kx, (B, N), jnp.float32)
    w1, b1 = init_linear(k1, N, H1, lane_dense=True)    # (20, N) == fc1.weight
    w2, b2 = init_linear(k2, H1, H2)                     # (20, 10)
    w3, b3 = init_linear(k3, H2, H1)                     # (10, 20)
    w4, b4 = init_linear(k4, H1, N)                      # (20, N)

    ref = sae_reference(x, w1, b1, w2, b2, w3, b3, w4, b4)

    # 1) f32 streaming path — tight tolerance.
    out_f32 = jax.block_until_ready(
        sae_forward(x, w1, b1, w2, b2, w3, b3, w4, b4))
    assert out_f32.shape == (B, N)
    assert jnp.allclose(out_f32, ref, atol=1e-5, rtol=1e-5)

    # 2) bf16 streaming path (halves HBM traffic for the dominant x/out
    #    streams; f32 accumulation in-kernel) — looser tolerance.
    out_bf16 = jax.block_until_ready(
        sae_forward(x.astype(jnp.bfloat16),
                    w1.astype(jnp.bfloat16), b1, w2, b2, w3, b3,
                    w4.astype(jnp.bfloat16), b4))
    assert out_bf16.dtype == jnp.bfloat16
    assert jnp.allclose(out_bf16.astype(jnp.float32), ref, atol=5e-2, rtol=5e-2)

    # 3) multi-tile path with a partial final batch block (no batch padding):
    #    B=20 with tile_b=8 -> grid of 3, last block half out-of-bounds.
    B2 = 20
    x2 = jax.random.normal(jax.random.PRNGKey(1), (B2, N), jnp.float32)
    ref2 = sae_reference(x2, w1, b1, w2, b2, w3, b3, w4, b4)
    out2 = jax.block_until_ready(
        sae_forward(x2, w1, b1, w2, b2, w3, b3, w4, b4, tile_b=8))
    assert out2.shape == (B2, N)
    assert jnp.allclose(out2, ref2, atol=1e-5, rtol=1e-5)

    print("KERNEL_OK")
</pallas_src>

<mosaic_0001>
module attributes {stable_mosaic.version = 11 : i64} {
  func.func @sae_kernel(%arg0: i32, %arg1: memref<6x200xf32, #tpu.memory_space<vmem>>, %arg2: memref<20x200xf32, #tpu.memory_space<vmem>>, %arg3: memref<1x20xf32, #tpu.memory_space<vmem>>, %arg4: memref<20x10xf32, #tpu.memory_space<vmem>>, %arg5: memref<1x10xf32, #tpu.memory_space<vmem>>, %arg6: memref<10x20xf32, #tpu.memory_space<vmem>>, %arg7: memref<1x20xf32, #tpu.memory_space<vmem>>, %arg8: memref<20x200xf32, #tpu.memory_space<vmem>>, %arg9: memref<1x200xf32, #tpu.memory_space<vmem>>, %arg10: memref<6x200xf32, #tpu.memory_space<vmem>>) attributes {dimension_semantics = [#tpu.dimension_semantics<parallel>], iteration_bounds = array<i64: 1>, scalar_prefetch = 0 : i64, scratch_operands = 0 : i64, tpu.core_type = #tpu.core_type<tc>, window_params = [{transform_indices = @transform_0, window_bounds = array<i64: 6, 200>}, {pipeline_mode = #tpu.pipeline_mode<synchronous>, transform_indices = @transform_1, window_bounds = array<i64: 20, 200>}, {pipeline_mode = #tpu.pipeline_mode<synchronous>, transform_indices = @transform_2, window_bounds = array<i64: 1, 20>}, {pipeline_mode = #tpu.pipeline_mode<synchronous>, transform_indices = @transform_3, window_bounds = array<i64: 20, 10>}, {pipeline_mode = #tpu.pipeline_mode<synchronous>, transform_indices = @transform_4, window_bounds = array<i64: 1, 10>}, {pipeline_mode = #tpu.pipeline_mode<synchronous>, transform_indices = @transform_5, window_bounds = array<i64: 10, 20>}, {pipeline_mode = #tpu.pipeline_mode<synchronous>, transform_indices = @transform_6, window_bounds = array<i64: 1, 20>}, {pipeline_mode = #tpu.pipeline_mode<synchronous>, transform_indices = @transform_7, window_bounds = array<i64: 20, 200>}, {pipeline_mode = #tpu.pipeline_mode<synchronous>, transform_indices = @transform_8, window_bounds = array<i64: 1, 200>}, {transform_indices = @transform_9, window_bounds = array<i64: 6, 200>}]} {
    %c0 = arith.constant 0 : index
    %c0_0 = arith.constant 0 : index
    %0 = vector.load %arg1[%c0, %c0_0] : memref<6x200xf32, #tpu.memory_space<vmem>>, vector<6x200xf32>
    %c0_1 = arith.constant 0 : index
    %c0_2 = arith.constant 0 : index
    %1 = vector.load %arg2[%c0_1, %c0_2] : memref<20x200xf32, #tpu.memory_space<vmem>>, vector<20x200xf32>
    %cst = arith.constant dense<0.000000e+00> : vector<6x20xf32>
    %2 = tpu.matmul %0, %1, %cst {dimension_numbers = #tpu.dot_dimension_numbers<[1], [1], [0], [0], [0, 0, 1, 0], [], []>} : vector<6x200xf32>, vector<20x200xf32>, vector<6x20xf32> -> vector<6x20xf32>
    %c0_3 = arith.constant 0 : index
    %c0_4 = arith.constant 0 : index
    %3 = vector.load %arg3[%c0_3, %c0_4] : memref<1x20xf32, #tpu.memory_space<vmem>>, vector<1x20xf32>
    %4 = vector.broadcast %3 : vector<1x20xf32> to vector<6x20xf32>
    %5 = arith.addf %2, %4 : vector<6x20xf32>
    %6 = arith.negf %5 : vector<6x20xf32>
    %7 = math.exp %6 : vector<6x20xf32>
    %cst_5 = arith.constant 1.000000e+00 : f32
    %8 = vector.broadcast %cst_5 : f32 to vector<6x20xf32>
    %9 = arith.addf %8, %7 : vector<6x20xf32>
    %10 = arith.divf %8, %9 : vector<6x20xf32>
    %c0_6 = arith.constant 0 : index
    %c0_7 = arith.constant 0 : index
    %11 = vector.load %arg4[%c0_6, %c0_7] : memref<20x10xf32, #tpu.memory_space<vmem>>, vector<20x10xf32>
    %cst_8 = arith.constant dense<0.000000e+00> : vector<6x10xf32>
    %12 = tpu.matmul %10, %11, %cst_8 {dimension_numbers = #tpu.dot_dimension_numbers<[1], [0], [0], [1], [0, 0, 1, 1], [], []>} : vector<6x20xf32>, vector<20x10xf32>, vector<6x10xf32> -> vector<6x10xf32>
    %c0_9 = arith.constant 0 : index
    %c0_10 = arith.constant 0 : index
    %13 = vector.load %arg5[%c0_9, %c0_10] : memref<1x10xf32, #tpu.memory_space<vmem>>, vector<1x10xf32>
    %14 = vector.broadcast %13 : vector<1x10xf32> to vector<6x10xf32>
    %15 = arith.addf %12, %14 : vector<6x10xf32>
    %16 = arith.negf %15 : vector<6x10xf32>
    %17 = math.exp %16 : vector<6x10xf32>
    %cst_11 = arith.constant 1.000000e+00 : f32
    %18 = vector.broadcast %cst_11 : f32 to vector<6x10xf32>
    %19 = arith.addf %18, %17 : vector<6x10xf32>
    %20 = arith.divf %18, %19 : vector<6x10xf32>
    %c0_12 = arith.constant 0 : index
    %c0_13 = arith.constant 0 : index
    %21 = vector.load %arg6[%c0_12, %c0_13] : memref<10x20xf32, #tpu.memory_space<vmem>>, vector<10x20xf32>
    %cst_14 = arith.constant dense<0.000000e+00> : vector<6x20xf32>
    %22 = tpu.matmul %20, %21, %cst_14 {dimension_numbers = #tpu.dot_dimension_numbers<[1], [0], [0], [1], [0, 0, 1, 1], [], []>} : vector<6x10xf32>, vector<10x20xf32>, vector<6x20xf32> -> vector<6x20xf32>
    %c0_15 = arith.constant 0 : index
    %c0_16 = arith.constant 0 : index
    %23 = vector.load %arg7[%c0_15, %c0_16] : memref<1x20xf32, #tpu.memory_space<vmem>>, vector<1x20xf32>
    %24 = vector.broadcast %23 : vector<1x20xf32> to vector<6x20xf32>
    %25 = arith.addf %22, %24 : vector<6x20xf32>
    %26 = arith.negf %25 : vector<6x20xf32>
    %27 = math.exp %26 : vector<6x20xf32>
    %cst_17 = arith.constant 1.000000e+00 : f32
    %28 = vector.broadcast %cst_17 : f32 to vector<6x20xf32>
    %29 = arith.addf %28, %27 : vector<6x20xf32>
    %30 = arith.divf %28, %29 : vector<6x20xf32>
    %c0_18 = arith.constant 0 : index
    %c0_19 = arith.constant 0 : index
    %31 = vector.load %arg8[%c0_18, %c0_19] : memref<20x200xf32, #tpu.memory_space<vmem>>, vector<20x200xf32>
    %cst_20 = arith.constant dense<0.000000e+00> : vector<6x200xf32>
    %32 = tpu.matmul %30, %31, %cst_20 {dimension_numbers = #tpu.dot_dimension_numbers<[1], [0], [0], [1], [0, 0, 1, 1], [], []>} : vector<6x20xf32>, vector<20x200xf32>, vector<6x200xf32> -> vector<6x200xf32>
    %c0_21 = arith.constant 0 : index
    %c0_22 = arith.constant 0 : index
    %33 = vector.load %arg9[%c0_21, %c0_22] : memref<1x200xf32, #tpu.memory_space<vmem>>, vector<1x200xf32>
    %34 = vector.broadcast %33 : vector<1x200xf32> to vector<6x200xf32>
    %35 = arith.addf %32, %34 : vector<6x200xf32>
    %c0_23 = arith.constant 0 : index
    %c0_24 = arith.constant 0 : index
    %36 = vector.load %arg10[%c0_23, %c0_24] : memref<6x200xf32, #tpu.memory_space<vmem>>, vector<6x200xf32>
    tpu.vector_store %arg10[%c0_23, %c0_24], %35 {strides = array<i32>} : memref<6x200xf32, #tpu.memory_space<vmem>>, vector<6x200xf32>,
    return
  }
  func.func @transform_0(%arg0: i32) -> (i32, i32) {
    %c0_i32 = arith.constant 0 : i32
    %c0_i32_0 = arith.constant 0 : i32
    return %arg0, %c0_i32 : i32, i32
  }
  func.func @transform_1(%arg0: i32) -> (i32, i32) {
    %c0_i32 = arith.constant 0 : i32
    %c0_i32_0 = arith.constant 0 : i32
    %c0_i32_1 = arith.constant 0 : i32
    return %c0_i32, %c0_i32_0 : i32, i32
  }
  func.func @transform_2(%arg0: i32) -> (i32, i32) {
    %c0_i32 = arith.constant 0 : i32
    %c0_i32_0 = arith.constant 0 : i32
    %c0_i32_1 = arith.constant 0 : i32
    return %c0_i32, %c0_i32_0 : i32, i32
  }
  func.func @transform_3(%arg0: i32) -> (i32, i32) {
    %c0_i32 = arith.constant 0 : i32
    %c0_i32_0 = arith.constant 0 : i32
    %c0_i32_1 = arith.constant 0 : i32
    return %c0_i32, %c0_i32_0 : i32, i32
  }
  func.func @transform_4(%arg0: i32) -> (i32, i32) {
    %c0_i32 = arith.constant 0 : i32
    %c0_i32_0 = arith.constant 0 : i32
    %c0_i32_1 = arith.constant 0 : i32
    return %c0_i32, %c0_i32_0 : i32, i32
  }
  func.func @transform_5(%arg0: i32) -> (i32, i32) {
    %c0_i32 = arith.constant 0 : i32
    %c0_i32_0 = arith.constant 0 : i32
    %c0_i32_1 = arith.constant 0 : i32
    return %c0_i32, %c0_i32_0 : i32, i32
  }
  func.func @transform_6(%arg0: i32) -> (i32, i32) {
    %c0_i32 = arith.constant 0 : i32
    %c0_i32_0 = arith.constant 0 : i32
    %c0_i32_1 = arith.constant 0 : i32
    return %c0_i32, %c0_i32_0 : i32, i32
  }
  func.func @transform_7(%arg0: i32) -> (i32, i32) {
    %c0_i32 = arith.constant 0 : i32
    %c0_i32_0 = arith.constant 0 : i32
    %c0_i32_1 = arith.constant 0 : i32
    return %c0_i32, %c0_i32_0 : i32, i32
  }
  func.func @transform_8(%arg0: i32) -> (i32, i32) {
    %c0_i32 = arith.constant 0 : i32
    %c0_i32_0 = arith.constant 0 : i32
    %c0_i32_1 = arith.constant 0 : i32
    return %c0_i32, %c0_i32_0 : i32, i32
  }
  func.func @transform_9(%arg0: i32) -> (i32, i32) {
    %c0_i32 = arith.constant 0 : i32
    %c0_i32_0 = arith.constant 0 : i32
    return %arg0, %c0_i32 : i32, i32
  }
}

</mosaic_0001>

<llo_original>
// kernel: sae_forward.1
$region0: #{sae_forward.1}
  #allocation0 [shape = 'u32[]', space=smem, size = 0x4, offset = 0x4, fixed_abs, tag = 'smem constant byte address 0x4 - core index']
  #allocation1 [shape = 'u32[144,128]{1,0:T(1,128)}', space=vmem, size = 0x12000, scoped, tag = 'internal scratch']
  %s0 = inlined_call_operand.vmem [shape: f32[6,200], index: 0, kind: input, shape index: {}]
  %s1 = inlined_call_operand.hbm [shape: f32[20,200], index: 1, kind: input, shape index: {}]
  %s2 = inlined_call_operand.hbm [shape: f32[1,20], index: 2, kind: input, shape index: {}]
  %s3 = inlined_call_operand.vmem [shape: f32[20,10], index: 3, kind: input, shape index: {}]
  %s4 = inlined_call_operand.hbm [shape: f32[1,10], index: 4, kind: input, shape index: {}]
  %s5 = inlined_call_operand.hbm [shape: f32[10,20], index: 5, kind: input, shape index: {}]
  %s6 = inlined_call_operand.hbm [shape: f32[1,20], index: 6, kind: input, shape index: {}]
  %s7 = inlined_call_operand.vmem [shape: f32[20,200], index: 7, kind: input, shape index: {}]
  %s8 = inlined_call_operand.vmem [shape: f32[1,200], index: 8, kind: input, shape index: {}]
  %s9 = inlined_call_operand.hbm [shape: f32[6,200], index: 9, kind: output, shape index: {}]
  %s10 = sld [smem:[#allocation0]]
  $region66: #{sae_forward.1} parent=0
    _
  %s12 = ssub.s32 1, %s10
  %s13 = scalar_select 0, %s12, %s10
  $region1: #{sae_forward.1} parent=0
    #allocation2 [shape = 'u8[24576]{0}', space=vmem, size = 0x6000, scoped, tag = 'input window, operand 1, single buffered']
    #allocation3 [shape = 's32[1]{0}', space=sflag, size = 0x4, scoped, tag = 'scoped memory for sae_forward.1']
    #allocation4 [shape = 's32[1]{0}', space=sflag, size = 0x4, scoped, tag = 'scoped memory for sae_forward.1']
    #allocation5 [shape = 'u8[512]{0}', space=vmem, size = 0x400, scoped, tag = 'input window, operand 2, single buffered']
    #allocation6 [shape = 's32[1]{0}', space=sflag, size = 0x4, scoped, tag = 'scoped memory for sae_forward.1']
    #allocation7 [shape = 'u8[512]{0}', space=vmem, size = 0x400, scoped, tag = 'input window, operand 4, single buffered']
    #allocation8 [shape = 'u8[8192]{0}', space=vmem, size = 0x2000, scoped, tag = 'input window, operand 5, single buffered']
    #allocation9 [shape = 's32[1]{0}', space=sflag, size = 0x4, scoped, tag = 'scoped memory for sae_forward.1']
    #allocation10 [shape = 'u8[512]{0}', space=vmem, size = 0x400, scoped, tag = 'input window, operand 6, single buffered']
    #allocation11 [shape = 'u8[8192]{0}', space=vmem, size = 0x2000, scoped, tag = 'output window, operand 0, single buffered']
    %14 = vsyncpa [#allocation3], 0
    %15 = vsyncpa [#allocation6], 0
    %16 = vsyncpa [#allocation9], 0
    %17 = vsyncpa [#allocation4], 0
    // Predicated region
    $region2: #{sae_forward.1} parent=1 // pred_check
      _
    $region3: #{sae_forward.1} parent=1 // pred_check_branch
      %19 = sbr.rel (0) target = $region5
    $region4: #{sae_forward.1} parent=1 // pred_region
      _
    $region5: #{sae_forward.1} parent=1 // pred_fallthru
      _
    // Predicated region
    $region6: #{sae_forward.1} parent=1 // pred_check
      _
    $region7: #{sae_forward.1} parent=1 // pred_check_branch
      %21 = sbr.rel (0) target = $region9
    $region8: #{sae_forward.1} parent=1 // pred_region
      %s23 = ssub.s32 768, 768
      %24 = vsyncadd [#allocation3], %s23
      %s25 = sshll.u32 [#allocation2], 4
      %s26 = int_to_ptr.vmem [resolvable:$true] %s25
      %31 = dma.hbm_to_vmem [thread:$0]  %s1, 768, %s26, [#allocation3], 256, 256, 16
    $region9: #{sae_forward.1} parent=1 // pred_fallthru
      _
    // Predicated region
    $region10: #{sae_forward.1} parent=1 // pred_check
      _
    $region11: #{sae_forward.1} parent=1 // pred_check_branch
      %33 = sbr.rel (0) target = $region13
    $region12: #{sae_forward.1} parent=1 // pred_region
      %s35 = ssub.s32 16, 16
      %36 = vsyncadd [#allocation6], %s35
      %s38 = sshll.u32 [#allocation5], 4
      %s39 = int_to_ptr.vmem [resolvable:$true] %s38
      %41 = dma.hbm_to_vmem [thread:$0]  %s2, 16, %s39, [#allocation6]
    $region13: #{sae_forward.1} parent=1 // pred_fallthru
      _
    // Predicated region
    $region14: #{sae_forward.1} parent=1 // pred_check
      _
    $region15: #{sae_forward.1} parent=1 // pred_check_branch
      %43 = sbr.rel (0) target = $region17
    $region16: #{sae_forward.1} parent=1 // pred_region
      _
    $region17: #{sae_forward.1} parent=1 // pred_fallthru
      _
    // Predicated region
    $region18: #{sae_forward.1} parent=1 // pred_check
      _
    $region19: #{sae_forward.1} parent=1 // pred_check_branch
      %45 = sbr.rel (0) target = $region21
    $region20: #{sae_forward.1} parent=1 // pred_region
      %s47 = ssub.s32 16, 16
      %48 = vsyncadd [#allocation6], %s47
      %s50 = sshll.u32 [#allocation7], 4
      %s51 = int_to_ptr.vmem [resolvable:$true] %s50
      %53 = dma.hbm_to_vmem [thread:$0]  %s4, 16, %s51, [#allocation6]
    $region21: #{sae_forward.1} parent=1 // pred_fallthru
      _
    // Predicated region
    $region22: #{sae_forward.1} parent=1 // pred_check
      _
    $region23: #{sae_forward.1} parent=1 // pred_check_branch
      %55 = sbr.rel (0) target = $region25
    $region24: #{sae_forward.1} parent=1 // pred_region
      %s57 = ssub.s32 256, 256
      %58 = vsyncadd [#allocation9], %s57
      %s59 = sshll.u32 [#allocation8], 4
      %s60 = int_to_ptr.vmem [resolvable:$true] %s59
      %65 = dma.hbm_to_vmem [thread:$0]  %s5, 256, %s60, [#allocation9], 128, 128, 8
    $region25: #{sae_forward.1} parent=1 // pred_fallthru
      _
    // Predicated region
    $region26: #{sae_forward.1} parent=1 // pred_check
      _
    $region27: #{sae_forward.1} parent=1 // pred_check_branch
      %67 = sbr.rel (0) target = $region29
    $region28: #{sae_forward.1} parent=1 // pred_region
      %s69 = ssub.s32 16, 16
      %70 = vsyncadd [#allocation9], %s69
      %s72 = sshll.u32 [#allocation10], 4
      %s73 = int_to_ptr.vmem [resolvable:$true] %s72
      %75 = dma.hbm_to_vmem [thread:$0]  %s6, 16, %s73, [#allocation9]
    $region29: #{sae_forward.1} parent=1 // pred_fallthru
      _
    // Predicated region
    $region30: #{sae_forward.1} parent=1 // pred_check
      _
    $region31: #{sae_forward.1} parent=1 // pred_check_branch
      %77 = sbr.rel (0) target = $region33
    $region32: #{sae_forward.1} parent=1 // pred_region
      _
    $region33: #{sae_forward.1} parent=1 // pred_fallthru
      _
    // Predicated region
    $region34: #{sae_forward.1} parent=1 // pred_check
      _
    $region35: #{sae_forward.1} parent=1 // pred_check_branch
      %79 = sbr.rel (0) target = $region37
    $region36: #{sae_forward.1} parent=1 // pred_region
      _
    $region37: #{sae_forward.1} parent=1 // pred_fallthru
      _
    // Predicated region
    $region38: #{sae_forward.1} parent=1 // pred_check
      _
    $region39: #{sae_forward.1} parent=1 // pred_check_branch
      %81 = sbr.rel (0) target = $region41
    $region40: #{sae_forward.1} parent=1 // pred_region
      %82 = dma.done [#allocation3], 768
    $region41: #{sae_forward.1} parent=1 // pred_fallthru
      _
    // Predicated region
    $region42: #{sae_forward.1} parent=1 // pred_check
      _
    $region43: #{sae_forward.1} parent=1 // pred_check_branch
      %84 = sbr.rel (0) target = $region45
    $region44: #{sae_forward.1} parent=1 // pred_region
      %85 = dma.done [#allocation6], 16
    $region45: #{sae_forward.1} parent=1 // pred_fallthru
      _
    // Predicated region
    $region46: #{sae_forward.1} parent=1 // pred_check
      _
    $region47: #{sae_forward.1} parent=1 // pred_check_branch
      %87 = sbr.rel (0) target = $region49
    $region48: #{sae_forward.1} parent=1 // pred_region
      %88 = dma.done [#allocation6], 16
    $region49: #{sae_forward.1} parent=1 // pred_fallthru
      _
    // Predicated region
    $region50: #{sae_forward.1} parent=1 // pred_check
      _
    $region51: #{sae_forward.1} parent=1 // pred_check_branch
      %90 = sbr.rel (0) target = $region53
    $region52: #{sae_forward.1} parent=1 // pred_region
      %91 = dma.done [#allocation9], 256
    $region53: #{sae_forward.1} parent=1 // pred_fallthru
      _
    // Predicated region
    $region54: #{sae_forward.1} parent=1 // pred_check
      _
    $region55: #{sae_forward.1} parent=1 // pred_check_branch
      %93 = sbr.rel (0) target = $region57
    $region56: #{sae_forward.1} parent=1 // pred_region
      %94 = dma.done [#allocation9], 16
    $region57: #{sae_forward.1} parent=1 // pred_fallthru
      _
    %v95 = vld [vmem:[%s0] sm:$0x3f]
    %v96 = vld [vmem:[%s0 + $0x8] sm:$0x3f]
    %v97 = vld [vmem:[#allocation2] sm:$0xff]
    %v98 = vld [vmem:[#allocation2 + $0x8] sm:$0xff]
    %v99 = vld [vmem:[#allocation2 + $0x10] sm:$0xff]
    %v100 = vld [vmem:[#allocation2 + $0x18] sm:$0xff]
    %v101 = vld [vmem:[#allocation2 + $0x20] sm:$0xf]
    %v102 = vld [vmem:[#allocation2 + $0x28] sm:$0xf]
    %v103 = vld [vmem:[#allocation5] sm:$0x1]
    %v105 = vlaneseq
    %v106 = vshrl.u32 %v105, 7
    %v107 = vsub.s32 0, %v106
    %v108 = vrot.slane %v103, %v107
    %vm110 = vcmask 588800
    %v112 = vsel %vm110, %v96, 0
    %v115 = vsel %vm110, %v98, 0
    %v118 = vsel %vm110, %v100, 0
    %v121 = vsel %vm110, %v102, 0
    %123 = vmatprep.subr.mxu0 %v115
    %124 = vmatpush1.xpose.msra.mxu0 %v97
    %125 = vmatprep.subr.mxu0 %v118
    %126 = vmatpush1.xpose.msra.mxu0 %v99
    %127 = vmatprep.subr.mxu0 %v121
    %128 = vmatpush1.xpose.msra.mxu0 %v101
    %129 = vmatprep.subr.mxu0 0.0
    %130 = vmatpush1.xpose.msra.mxu0 0.0
    %131 = vmatprep.subr.mxu0 0.0
    %132 = vmatpush1.xpose.msra.mxu0 0.0
    %133 = vmatprep.subr.mxu0 0.0
    %134 = vmatpush1.xpose.msra.mxu0 0.0
    %135 = vmatprep.subr.mxu0 0.0
    %136 = vmatpush1.xpose.msra.mxu0 0.0
    %137 = vmatprep.subr.mxu0 0.0
    %138 = vmatpush1.xpose.msra.mxu0 0.0
    %139 = vmatprep.subr.mxu0 0.0
    %140 = vmatpush1.xpose.msra.mxu0 0.0
    %141 = vmatprep.subr.mxu0 0.0
    %142 = vmatpush1.xpose.msra.mxu0 0.0
    %143 = vmatprep.subr.mxu0 0.0
    %144 = vmatpush1.xpose.msra.mxu0 0.0
    %145 = vmatprep.subr.mxu0 0.0
    %146 = vmatpush1.xpose.msra.mxu0 0.0
    %147 = vmatprep.subr.mxu0 0.0
    %148 = vmatpush1.xpose.msra.mxu0 0.0
    %149 = vmatprep.subr.mxu0 0.0
    %150 = vmatpush1.xpose.msra.mxu0 0.0
    %151 = vmatprep.subr.mxu0 0.0
    %152 = vmatpush1.xpose.msra.mxu0 0.0
    %153 = vmatprep.subr.mxu0 0.0
    %154 = vmatpush1.xpose.msra.mxu0 0.0
    %155 = vmatprep.subr.mxu0 0.0
    %156 = vmatpush1.xpose.msra.mxu0 0.0
    %157 = vmatprep.subr.mxu0 0.0
    %158 = vmatpush1.xpose.msra.mxu0 0.0
    %159 = vmatprep.subr.mxu0 0.0
    %160 = vmatpush1.xpose.msra.mxu0 0.0
    %161 = vmatprep.subr.mxu0 0.0
    %162 = vmatpush1.xpose.msra.mxu0 0.0
    %163 = vmatprep.subr.mxu0 0.0
    %164 = vmatpush1.xpose.msra.mxu0 0.0
    %165 = vmatprep.subr.mxu0 0.0
    %166 = vmatpush1.xpose.msra.mxu0 0.0
    %167 = vmatprep.subr.mxu0 0.0
    %168 = vmatpush1.xpose.msra.mxu0 0.0
    %169 = vmatprep.subr.mxu0 0.0
    %170 = vmatpush1.xpose.msra.mxu0 0.0
    %171 = vmatprep.subr.mxu0 0.0
    %172 = vmatpush1.xpose.msra.mxu0 0.0
    %173 = vmatprep.subr.mxu0 0.0
    %174 = vmatpush1.xpose.msra.mxu0 0.0
    %175 = vmatprep.subr.mxu0 0.0
    %176 = vmatpush1.xpose.msra.mxu0 0.0
    %177 = vmatprep.subr.mxu0 0.0
    %178 = vmatpush1.xpose.msra.mxu0 0.0
    %179 = vmatprep.subr.mxu0 0.0
    %180 = vmatpush1.xpose.msra.mxu0 0.0
    %181 = vmatprep.subr.mxu0 0.0
    %182 = vmatpush1.xpose.msra.mxu0 0.0
    %183 = vmatprep.subr.mxu0 0.0
    %184 = vmatpush1.xpose.msra.mxu0 0.0
    %185 = vmatprep.subr.mxu0 0.0
    %186 = vmatpush1.xpose.msra.mxu0 0.0
    %187 = vmatprep.mubr.f32.mxu0 %v112
    %188 = vmatmul.mubr.f32.gmra.mrb[0].mxu0 %v95
    %v189 = vpop.f32.mrb[0].mxu0
    %v190 = vadd.f32 %v108, %v189
    %v191 = vpop.f32.mrb[0].mxu0
    %192 = vdwg.mxu0
    %v193 = vxor.u32 %v190, 2147483648
    %v194 = vmul.f32 %v193, 1.442695
    %v195 = vpow.pop %v194
    %v196 = vadd.f32 %v195, 1.0
    %v197 = vrcp.pop %v196
    %v198 = vmul.f32 1.0, %v197
    %v199 = vld [vmem:[%s3] sm:$0xff]
    %v200 = vld [vmem:[%s3 + $0x8] sm:$0xff]
    %v201 = vld [vmem:[%s3 + $0x10] sm:$0xf]
    %v202 = vld [vmem:[#allocation7] sm:$0x1]
    %v204 = vlaneseq
    %v205 = vshrl.u32 %v204, 7
    %v206 = vsub.s32 0, %v205
    %v207 = vrot.slane %v202, %v206
    %vm209 = vcmask 162816
    %v211 = vsel %vm209, %v198, 0
    %vm213 = vcmask 1043456
    %v215 = vsel %vm213, %v201, 0
    %217 = vmatprep.subr.mxu0 0.0
    %218 = vmatpush1.msra.mxu0 %v199
    %219 = vmatprep.subr.mxu0 0.0
    %220 = vmatpush1.msra.mxu0 %v200
    %221 = vmatprep.subr.mxu0 0.0
    %222 = vmatpush1.msra.mxu0 %v215
    %223 = vmatprep.subr.mxu0 0.0
    %224 = vmatpush1.msra.mxu0 0.0
    %225 = vmatprep.subr.mxu0 0.0
    %226 = vmatpush1.msra.mxu0 0.0
    %227 = vmatprep.subr.mxu0 0.0
    %228 = vmatpush1.msra.mxu0 0.0
    %229 = vmatprep.subr.mxu0 0.0
    %230 = vmatpush1.msra.mxu0 0.0
    %231 = vmatprep.subr.mxu0 0.0
    %232 = vmatpush1.msra.mxu0 0.0
    %233 = vmatprep.subr.mxu0 0.0
    %234 = vmatpush1.msra.mxu0 0.0
    %235 = vmatprep.subr.mxu0 0.0
    %236 = vmatpush1.msra.mxu0 0.0
    %237 = vmatprep.subr.mxu0 0.0
    %238 = vmatpush1.msra.mxu0 0.0
    %239 = vmatprep.subr.mxu0 0.0
    %240 = vmatpush1.msra.mxu0 0.0
    %241 = vmatprep.subr.mxu0 0.0
    %242 = vmatpush1.msra.mxu0 0.0
    %243 = vmatprep.subr.mxu0 0.0
    %244 = vmatpush1.msra.mxu0 0.0
    %245 = vmatprep.subr.mxu0 0.0
    %246 = vmatpush1.msra.mxu0 0.0
    %247 = vmatprep.subr.mxu0 0.0
    %248 = vmatpush1.msra.mxu0 0.0
    %249 = vmatprep.subr.mxu0 0.0
    %250 = vmatpush1.msra.mxu0 0.0
    %251 = vmatprep.subr.mxu0 0.0
    %252 = vmatpush1.msra.mxu0 0.0
    %253 = vmatprep.subr.mxu0 0.0
    %254 = vmatpush1.msra.mxu0 0.0
    %255 = vmatprep.subr.mxu0 0.0
    %256 = vmatpush1.msra.mxu0 0.0
    %257 = vmatprep.subr.mxu0 0.0
    %258 = vmatpush1.msra.mxu0 0.0
    %259 = vmatprep.subr.mxu0 0.0
    %260 = vmatpush1.msra.mxu0 0.0
    %261 = vmatprep.subr.mxu0 0.0
    %262 = vmatpush1.msra.mxu0 0.0
    %263 = vmatprep.subr.mxu0 0.0
    %264 = vmatpush1.msra.mxu0 0.0
    %265 = vmatprep.subr.mxu0 0.0
    %266 = vmatpush1.msra.mxu0 0.0
    %267 = vmatprep.subr.mxu0 0.0
    %268 = vmatpush1.msra.mxu0 0.0
    %269 = vmatprep.subr.mxu0 0.0
    %270 = vmatpush1.msra.mxu0 0.0
    %271 = vmatprep.subr.mxu0 0.0
    %272 = vmatpush1.msra.mxu0 0.0
    %273 = vmatprep.subr.mxu0 0.0
    %274 = vmatpush1.msra.mxu0 0.0
    %275 = vmatprep.subr.mxu0 0.0
    %276 = vmatpush1.msra.mxu0 0.0
    %277 = vmatprep.subr.mxu0 0.0
    %278 = vmatpush1.msra.mxu0 0.0
    %279 = vmatprep.subr.mxu0 0.0
    %280 = vmatpush1.msra.mxu0 0.0
    %281 = vmatprep.mubr.f32.mxu0 0.0
    %282 = vmatmul.mubr.f32.gmra.mrb[0].mxu0 %v211
    %v283 = vpop.f32.mrb[0].mxu0
    %v284 = vadd.f32 %v207, %v283
    %v285 = vpop.f32.mrb[0].mxu0
    %286 = vdwg.mxu0
    %v287 = vxor.u32 %v284, 2147483648
    %v288 = vmul.f32 %v287, 1.442695
    %v289 = vpow.pop %v288
    %v290 = vadd.f32 %v289, 1.0
    %v291 = vrcp.pop %v290
    %v292 = vmul.f32 1.0, %v291
    %v293 = vld [vmem:[#allocation8] sm:$0xff]
    %v294 = vld [vmem:[#allocation8 + $0x8] sm:$0x3]
    %v295 = vld [vmem:[#allocation10] sm:$0x1]
    %v297 = vlaneseq
    %v298 = vshrl.u32 %v297, 7
    %v299 = vsub.s32 0, %v298
    %v300 = vrot.slane %v295, %v299
    %vm302 = vcmask 80896
    %v304 = vsel %vm302, %v292, 0
    %vm306 = vcmask 1041408
    %v308 = vsel %vm306, %v294, 0
    %310 = vmatprep.subr.mxu0 0.0
    %311 = vmatpush1.msra.mxu0 %v293
    %312 = vmatprep.subr.mxu0 0.0
    %313 = vmatpush1.msra.mxu0 %v308
    %314 = vmatprep.subr.mxu0 0.0
    %315 = vmatpush1.msra.mxu0 0.0
    %316 = vmatprep.subr.mxu0 0.0
    %317 = vmatpush1.msra.mxu0 0.0
    %318 = vmatprep.subr.mxu0 0.0
    %319 = vmatpush1.msra.mxu0 0.0
    %320 = vmatprep.subr.mxu0 0.0
    %321 = vmatpush1.msra.mxu0 0.0
    %322 = vmatprep.subr.mxu0 0.0
    %323 = vmatpush1.msra.mxu0 0.0
    %324 = vmatprep.subr.mxu0 0.0
    %325 = vmatpush1.msra.mxu0 0.0
    %326 = vmatprep.subr.mxu0 0.0
    %327 = vmatpush1.msra.mxu0 0.0
    %328 = vmatprep.subr.mxu0 0.0
    %329 = vmatpush1.msra.mxu0 0.0
    %330 = vmatprep.subr.mxu0 0.0
    %331 = vmatpush1.msra.mxu0 0.0
    %332 = vmatprep.subr.mxu0 0.0
    %333 = vmatpush1.msra.mxu0 0.0
    %334 = vmatprep.subr.mxu0 0.0
    %335 = vmatpush1.msra.mxu0 0.0
    %336 = vmatprep.subr.mxu0 0.0
    %337 = vmatpush1.msra.mxu0 0.0
    %338 = vmatprep.subr.mxu0 0.0
    %339 = vmatpush1.msra.mxu0 0.0
    %340 = vmatprep.subr.mxu0 0.0
    %341 = vmatpush1.msra.mxu0 0.0
    %342 = vmatprep.subr.mxu0 0.0
    %343 = vmatpush1.msra.mxu0 0.0
    %344 = vmatprep.subr.mxu0 0.0
    %345 = vmatpush1.msra.mxu0 0.0
    %346 = vmatprep.subr.mxu0 0.0
    %347 = vmatpush1.msra.mxu0 0.0
    %348 = vmatprep.subr.mxu0 0.0
    %349 = vmatpush1.msra.mxu0 0.0
    %350 = vmatprep.subr.mxu0 0.0
    %351 = vmatpush1.msra.mxu0 0.0
    %352 = vmatprep.subr.mxu0 0.0
    %353 = vmatpush1.msra.mxu0 0.0
    %354 = vmatprep.subr.mxu0 0.0
    %355 = vmatpush1.msra.mxu0 0.0
    %356 = vmatprep.subr.mxu0 0.0
    %357 = vmatpush1.msra.mxu0 0.0
    %358 = vmatprep.subr.mxu0 0.0
    %359 = vmatpush1.msra.mxu0 0.0
    %360 = vmatprep.subr.mxu0 0.0
    %361 = vmatpush1.msra.mxu0 0.0
    %362 = vmatprep.subr.mxu0 0.0
    %363 = vmatpush1.msra.mxu0 0.0
    %364 = vmatprep.subr.mxu0 0.0
    %365 = vmatpush1.msra.mxu0 0.0
    %366 = vmatprep.subr.mxu0 0.0
    %367 = vmatpush1.msra.mxu0 0.0
    %368 = vmatprep.subr.mxu0 0.0
    %369 = vmatpush1.msra.mxu0 0.0
    %370 = vmatprep.subr.mxu0 0.0
    %371 = vmatpush1.msra.mxu0 0.0
    %372 = vmatprep.subr.mxu0 0.0
    %373 = vmatpush1.msra.mxu0 0.0
    %374 = vmatprep.mubr.f32.mxu0 0.0
    %375 = vmatmul.mubr.f32.gmra.mrb[0].mxu0 %v304
    %v376 = vpop.f32.mrb[0].mxu0
    %v377 = vadd.f32 %v300, %v376
    %v378 = vpop.f32.mrb[0].mxu0
    %379 = vdwg.mxu0
    %v380 = vxor.u32 %v377, 2147483648
    %v381 = vmul.f32 %v380, 1.442695
    %v382 = vpow.pop %v381
    %v383 = vadd.f32 %v382, 1.0
    %v384 = vrcp.pop %v383
    %v385 = vmul.f32 1.0, %v384
    %v386 = vld [vmem:[%s7] sm:$0xff]
    %v387 = vld [vmem:[%s7 + $0x8] sm:$0xff]
    %v388 = vld [vmem:[%s7 + $0x10] sm:$0xff]
    %v389 = vld [vmem:[%s7 + $0x18] sm:$0xff]
    %v390 = vld [vmem:[%s7 + $0x20] sm:$0xf]
    %v391 = vld [vmem:[%s7 + $0x28] sm:$0xf]
    %v392 = vld [vmem:[%s8] sm:$0x3]
    %v394 = vlaneseq
    %v395 = vshrl.u32 %v394, 7
    %v396 = vsub.s32 0, %v395
    %v397 = vrot.slane %v392, %v396
    %v398 = vlaneseq
    %v399 = vshrl.u32 %v398, 7
    %v400 = vsub.s32 1, %v399
    %v401 = vrot.slane %v392, %v400
    %v405 = vsel %vm209, %v385, 0
    %v408 = vsel %vm213, %v390, 0
    %v411 = vsel %vm213, %v391, 0
    %413 = vmatprep.subr.mxu0 %v387
    %414 = vmatpush1.msra.mxu0 %v386
    %415 = vmatprep.subr.mxu0 %v389
    %416 = vmatpush1.msra.mxu0 %v388
    %417 = vmatprep.subr.mxu0 %v411
    %418 = vmatpush1.msra.mxu0 %v408
    %419 = vmatprep.subr.mxu0 0.0
    %420 = vmatpush1.msra.mxu0 0.0
    %421 = vmatprep.subr.mxu0 0.0
    %422 = vmatpush1.msra.mxu0 0.0
    %423 = vmatprep.subr.mxu0 0.0
    %424 = vmatpush1.msra.mxu0 0.0
    %425 = vmatprep.subr.mxu0 0.0
    %426 = vmatpush1.msra.mxu0 0.0
    %427 = vmatprep.subr.mxu0 0.0
    %428 = vmatpush1.msra.mxu0 0.0
    %429 = vmatprep.subr.mxu0 0.0
    %430 = vmatpush1.msra.mxu0 0.0
    %431 = vmatprep.subr.mxu0 0.0
    %432 = vmatpush1.msra.mxu0 0.0
    %433 = vmatprep.subr.mxu0 0.0
    %434 = vmatpush1.msra.mxu0 0.0
    %435 = vmatprep.subr.mxu0 0.0
    %436 = vmatpush1.msra.mxu0 0.0
    %437 = vmatprep.subr.mxu0 0.0
    %438 = vmatpush1.msra.mxu0 0.0
    %439 = vmatprep.subr.mxu0 0.0
    %440 = vmatpush1.msra.mxu0 0.0
    %441 = vmatprep.subr.mxu0 0.0
    %442 = vmatpush1.msra.mxu0 0.0
    %443 = vmatprep.subr.mxu0 0.0
    %444 = vmatpush1.msra.mxu0 0.0
    %445 = vmatprep.subr.mxu0 0.0
    %446 = vmatpush1.msra.mxu0 0.0
    %447 = vmatprep.subr.mxu0 0.0
    %448 = vmatpush1.msra.mxu0 0.0
    %449 = vmatprep.subr.mxu0 0.0
    %450 = vmatpush1.msra.mxu0 0.0
    %451 = vmatprep.subr.mxu0 0.0
    %452 = vmatpush1.msra.mxu0 0.0
    %453 = vmatprep.subr.mxu0 0.0
    %454 = vmatpush1.msra.mxu0 0.0
    %455 = vmatprep.subr.mxu0 0.0
    %456 = vmatpush1.msra.mxu0 0.0
    %457 = vmatprep.subr.mxu0 0.0
    %458 = vmatpush1.msra.mxu0 0.0
    %459 = vmatprep.subr.mxu0 0.0
    %460 = vmatpush1.msra.mxu0 0.0
    %461 = vmatprep.subr.mxu0 0.0
    %462 = vmatpush1.msra.mxu0 0.0
    %463 = vmatprep.subr.mxu0 0.0
    %464 = vmatpush1.msra.mxu0 0.0
    %465 = vmatprep.subr.mxu0 0.0
    %466 = vmatpush1.msra.mxu0 0.0
    %467 = vmatprep.subr.mxu0 0.0
    %468 = vmatpush1.msra.mxu0 0.0
    %469 = vmatprep.subr.mxu0 0.0
    %470 = vmatpush1.msra.mxu0 0.0
    %471 = vmatprep.subr.mxu0 0.0
    %472 = vmatpush1.msra.mxu0 0.0
    %473 = vmatprep.subr.mxu0 0.0
    %474 = vmatpush1.msra.mxu0 0.0
    %475 = vmatprep.subr.mxu0 0.0
    %476 = vmatpush1.msra.mxu0 0.0
    %477 = vmatprep.mubr.f32.mxu0 0.0
    %478 = vmatmul.mubr.f32.gmra.mrb[0].mxu0 %v405
    %v479 = vpop.f32.mrb[0].mxu0
    %v480 = vadd.f32 %v397, %v479
    %v481 = vpop.f32.mrb[0].mxu0
    %v482 = vadd.f32 %v401, %v481
    %483 = vdwg.mxu0
    %484 = vst [vmem:[#allocation11] sm:$0x3f] %v480
    %vm485 = vcmask 586752
    %486 = vst.msk [vmem:[#allocation11 + $0x8] sm:$0x3f] %vm485, %v482
    // Predicated region
    $region58: #{sae_forward.1} parent=1 // pred_check
      _
    $region59: #{sae_forward.1} parent=1 // pred_check_branch
      %488 = sbr.rel (0) target = $region61
    $region60: #{sae_forward.1} parent=1 // pred_region
      %s490 = ssub.s32 256, 256
      %491 = vsyncadd [#allocation4], %s490
      %s493 = sshll.u32 [#allocation11], 4
      %s494 = int_to_ptr.vmem [resolvable:$true] %s493
      %496 = dma.vmem_to_hbm [thread:$0]  %s494, 256, %s9, [#allocation4]
    $region61: #{sae_forward.1} parent=1 // pred_fallthru
      _
    // Predicated region
    $region62: #{sae_forward.1} parent=1 // pred_check
      _
    $region63: #{sae_forward.1} parent=1 // pred_check_branch
      %498 = sbr.rel (0) target = $region65
    $region64: #{sae_forward.1} parent=1 // pred_region
      %499 = dma.done [#allocation4], 256
    $region65: #{sae_forward.1} parent=1 // pred_fallthru
      _
    %500 = vsyncpa [#allocation3], 1
    %501 = vsyncpa [#allocation6], 1
    %502 = vsyncpa [#allocation9], 1
    %503 = vsyncpa [#allocation4], 1

</llo_original>
